<compile_context>
chip_gen: v7x
topology: tpu7x:2x2x1
jax: 0.10.0
libtpu: 0.0.40
codegen_flags: <defaults>
</compile_context>

<pallas_src>
import jax
import jax.numpy as jnp
from jax import lax
from jax.experimental import pallas as pl
from jax.experimental.pallas import tpu as pltpu


def _ceil_div(a, b):
    return -(-a // b)


# ----------------------------------------------------------------------------
# Fused whole-network kernel:  (Conv1d(+folded BN) -> bias -> ReLU) per block
# ----------------------------------------------------------------------------
def make_temporal_rf_kernel(meta, stride, l_in, l_pad, center):
    """meta: tuple of (k_max, c_in, c_out) per block — static Python ints."""
    n_layers = len(meta)
    l_sub = _ceil_div(l_pad, stride)          # per-layer matmul width (static)

    def kernel(x_ref, *refs):
        # refs = w0, b0, w1, b1, ..., o_ref, buf0, buf1
        #   w_i : (C_out_i, K_i*C_in_i)  bf16, BN scale folded in
        #   b_i : (C_out_i, 1)           f32  folded bias
        #   bufX: (C_max, center + l_pad + PR) bf16 ping-pong activation buffers
        o_ref = refs[-3]
        bufs = (refs[-2], refs[-1])

        # Zero both ping-pong buffers once per grid step; this is what makes
        # the left/right conv halos and the lane-padding columns true zeros.
        bufs[0][...] = jnp.zeros_like(bufs[0])
        bufs[1][...] = jnp.zeros_like(bufs[1])

        # Stage the bf16 input into the lane-aligned center of buffer 0.
        c_in0 = meta[0][1]
        bufs[0][:c_in0, center:center + l_in] = x_ref[...].astype(jnp.bfloat16)

        src_idx = 0
        l_valid = l_in
        for li, (k, c_in, c_out) in enumerate(meta):
            w = refs[2 * li][...]             # (c_out, k*c_in) bf16
            b = refs[2 * li + 1][...]         # (c_out, 1)      f32
            src = bufs[src_idx]
            pad_l = (k - 1) // 2

            # im2col built straight off the scratch ref, already in bf16.
            # For stride > 1 the window columns are sub-sampled BEFORE the
            # matmul, so the MXU and epilogue only touch the kept columns.
            pieces = []
            for kk in range(k):
                start = center - pad_l + kk
                if stride == 1:
                    pieces.append(src[:c_in, start:start + l_pad])
                else:
                    pieces.append(src[:c_in, pl.ds(start, l_sub, stride=stride)])
            win = pieces[0] if k == 1 else jnp.concatenate(pieces, axis=0)

            # One MXU matmul per layer: f32 accumulation, f32 epilogue.
            acc = jnp.dot(w, win, preferred_element_type=jnp.float32)
            y = jnp.maximum(acc + b, 0.0)     # (c_out, l_sub) f32

            l_valid = _ceil_div(l_valid, stride)
            if li == n_layers - 1:
                # Lane-dense unmasked store; wrapper slices off the padding.
                o_ref[...] = y.astype(o_ref.dtype)
            else:
                # Zero the lane-padding columns so the next layer's windows
                # see true zeros there (they would otherwise hold relu(bias)).
                if l_sub > l_valid:
                    col = lax.broadcasted_iota(jnp.int32, (c_out, l_sub), 1)
                    y = jnp.where(col < l_valid, y, 0.0)
                dst = bufs[1 - src_idx]
                dst[:c_out, center:center + l_sub] = y.astype(jnp.bfloat16)
                if l_sub < l_pad:             # only reachable when stride > 1
                    dst[:c_out, center + l_sub:center + l_pad] = jnp.zeros(
                        (c_out, l_pad - l_sub), jnp.bfloat16)
                src_idx = 1 - src_idx

    return kernel


def temporal_rf_forward(x_ncl, params, stride=1):
    """x_ncl: (N, C_in, L) PyTorch NCL layout. Returns (N, C_out, L_out) bf16."""
    n, c_in0, l_in = x_ncl.shape
    meta = tuple((p["k"], p["c_in"], p["c_out"]) for p in params)
    assert meta[0][1] == c_in0

    # Lane-dense layout: time axis rounded up to a multiple of 128 (>= 128).
    l_pad = max(128, _ceil_div(l_in, 128) * 128)
    pl_max = max((k - 1) // 2 for k, _, _ in meta)
    pr_max = max(k // 2 for k, _, _ in meta)
    # Left halo rounded up so the per-layer activation store stays lane-aligned.
    center = 0 if pl_max == 0 else _ceil_div(pl_max, 128) * 128
    buf_w = center + l_pad + pr_max
    c_max = max([c_in0] + [c_out for _, _, c_out in meta])

    l_sub = _ceil_div(l_pad, stride)          # stored (padded) output width
    l_valid = l_in
    for _ in meta:
        l_valid = _ceil_div(l_valid, stride)  # true output length
    c_out_last = meta[-1][2]

    kernel = make_temporal_rf_kernel(meta, stride, l_in, l_pad, center)

    in_specs = [pl.BlockSpec((pl.Squeezed(), c_in0, l_in), lambda b: (b, 0, 0))]
    args = [x_ncl.astype(jnp.bfloat16)]       # bf16 activations end-to-end
    for p in params:
        w, bias = p["weight"], p["bias"]
        in_specs.append(pl.BlockSpec(w.shape, lambda b: (0, 0)))
        in_specs.append(pl.BlockSpec(bias.shape, lambda b: (0, 0)))
        args.extend([w, bias])

    out_spec = pl.BlockSpec((pl.Squeezed(), c_out_last, l_sub),
                            lambda b: (b, 0, 0))

    out = pl.pallas_call(
        kernel,
        out_shape=jax.ShapeDtypeStruct((n, c_out_last, l_sub), jnp.bfloat16),
        grid_spec=pltpu.PrefetchScalarGridSpec(
            num_scalar_prefetch=0,
            grid=(n,),
            in_specs=in_specs,
            out_specs=out_spec,
            scratch_shapes=[pltpu.VMEM((c_max, buf_w), jnp.bfloat16),
                            pltpu.VMEM((c_max, buf_w), jnp.bfloat16)],
        ),
        compiler_params=pltpu.CompilerParams(
            dimension_semantics=("parallel",),
            # Default scoped VMEM is only 16/32 MiB on v5e/v6e; raise it so the
            # fused working set never forces tiny implicit tiles.  64 MiB is
            # within physical VMEM on every current chip (incl. v7x).
            vmem_limit_bytes=64 * 1024 * 1024),
    )(*args)

    # Drop the lane padding; downstream sees the true (N, C_out, L_out) view.
    return out[:, :, :l_valid]


# ----------------------------------------------------------------------------
# Parameter construction (deterministic, synthetic — no checkpoint loading)
# ----------------------------------------------------------------------------
def build_temporal_rf_params(layer_parameter_list, key):
    """For every block, fold all parallel (Conv1d + BN) branches into a single
    (C_out_total, K_max*C_in) bf16 weight (BN scale folded in) + f32 bias."""
    eps = 1e-5
    params = []
    for block in layer_parameter_list:
        k_max = max(p[2] for p in block)
        c_in = block[0][0]
        c_out_total = sum(p[1] for p in block)
        pad_l_max = (k_max - 1) // 2

        w_full = jnp.zeros((c_out_total, k_max, c_in), jnp.float32)
        bias_full = jnp.zeros((c_out_total,), jnp.float32)

        co = 0
        for (in_ch, out_ch, ksz) in block:
            key, kw, kb, kg, kbeta = jax.random.split(key, 5)
            # PyTorch Conv1d weight layout: (out_ch, in_ch, k)
            w = 0.1 * jax.random.normal(kw, (out_ch, in_ch, ksz), jnp.float32)
            conv_bias = 0.1 * jax.random.normal(kb, (out_ch,), jnp.float32)
            gamma = 1.0 + 0.05 * jax.random.normal(kg, (out_ch,), jnp.float32)
            beta = 0.05 * jax.random.normal(kbeta, (out_ch,), jnp.float32)
            running_mean = jnp.zeros((out_ch,), jnp.float32)
            running_var = jnp.ones((out_ch,), jnp.float32)

            # Fold BN (eval mode) + conv bias: scale goes into the weight.
            scale = gamma / jnp.sqrt(running_var + eps)
            bias = beta + (conv_bias - running_mean) * scale

            # Embed this branch kernel into the K_max-tap fused kernel with
            # the correct "same padding" center offset.
            offset = pad_l_max - (ksz - 1) // 2
            w_oki = jnp.transpose(w, (0, 2, 1)) * scale[:, None, None]
            w_full = w_full.at[co:co + out_ch, offset:offset + ksz, :].set(w_oki)
            bias_full = bias_full.at[co:co + out_ch].set(bias)
            co += out_ch

        params.append(dict(
            weight=w_full.reshape(c_out_total, k_max * c_in).astype(jnp.bfloat16),
            bias=bias_full.reshape(c_out_total, 1),
            k=k_max, c_in=c_in, c_out=c_out_total))
    return params


# ----------------------------------------------------------------------------
# Pure-JAX reference (identical math: bf16 activations, bf16 im2col, f32 acc)
# ----------------------------------------------------------------------------
def temporal_rf_reference(x_ncl, params, stride=1):
    x = x_ncl.astype(jnp.bfloat16)                     # (N, C, L)
    for p in params:
        k = p["k"]
        pad_l, pad_r = (k - 1) // 2, k // 2
        l_in = x.shape[2]
        xp = jnp.pad(x, ((0, 0), (0, 0), (pad_l, pad_r)))
        win = jnp.concatenate([xp[:, :, kk:kk + l_in] for kk in range(k)],
                              axis=1)                  # (N, K*C_in, L) bf16
        if stride > 1:
            win = win[:, :, ::stride]
        acc = jnp.einsum("ok,nkl->nol", p["weight"], win,
                         preferred_element_type=jnp.float32)
        y = jnp.maximum(acc + p["bias"][None], 0.0)
        x = y.astype(jnp.bfloat16)
    return x


if __name__ == "__main__":
    key = jax.random.PRNGKey(0)
    key, kx = jax.random.split(key)

    # Small synthetic config consistent with the module's constructor:
    #   layer_parameter_list[i] = list of (in_channels, out_channels, kernel)
    layer_parameter_list = [
        [(4, 8, 3), (4, 8, 5)],     # block 0: 4  -> 16 channels
        [(16, 8, 3), (16, 8, 5)],   # block 1: 16 -> 16 channels
    ]
    stride = 1

    N, C, L = 2, 4, 16
    x = jax.random.normal(kx, (N, C, L), jnp.float32)  # PyTorch NCL input

    params = build_temporal_rf_params(layer_parameter_list, key)

    out = temporal_rf_forward(x, params, stride=stride)
    out = jax.block_until_ready(out)

    ref = temporal_rf_reference(x, params, stride=stride)
    assert out.shape == (N, 16, L), out.shape
    assert jnp.allclose(out.astype(jnp.float32), ref.astype(jnp.float32),
                        atol=2e-2, rtol=2e-2), "mismatch vs reference"

    print("KERNEL_OK")
</pallas_src>

<mosaic_0001>
module attributes {stable_mosaic.version = 11 : i64} {
  func.func @kernel(%arg0: i32, %arg1: memref<1x4x16xbf16, #tpu.memory_space<vmem>>, %arg2: memref<16x20xbf16, #tpu.memory_space<vmem>>, %arg3: memref<16x1xf32, #tpu.memory_space<vmem>>, %arg4: memref<16x80xbf16, #tpu.memory_space<vmem>>, %arg5: memref<16x1xf32, #tpu.memory_space<vmem>>, %arg6: memref<1x16x128xbf16, #tpu.memory_space<vmem>>, %arg7: memref<16x258xbf16, #tpu.memory_space<vmem>>, %arg8: memref<16x258xbf16, #tpu.memory_space<vmem>>) attributes {dimension_semantics = [#tpu.dimension_semantics<parallel>], iteration_bounds = array<i64: 2>, scalar_prefetch = 0 : i64, scratch_operands = 2 : i64, tpu.core_type = #tpu.core_type<tc>, window_params = [{transform_indices = @transform_0, window_bounds = array<i64: 1, 4, 16>}, {pipeline_mode = #tpu.pipeline_mode<synchronous>, transform_indices = @transform_1, window_bounds = array<i64: 16, 20>}, {pipeline_mode = #tpu.pipeline_mode<synchronous>, transform_indices = @transform_2, window_bounds = array<i64: 16, 1>}, {pipeline_mode = #tpu.pipeline_mode<synchronous>, transform_indices = @transform_3, window_bounds = array<i64: 16, 80>}, {pipeline_mode = #tpu.pipeline_mode<synchronous>, transform_indices = @transform_4, window_bounds = array<i64: 16, 1>}, {transform_indices = @transform_5, window_bounds = array<i64: 1, 16, 128>}]} {
    %cst = arith.constant 0.000000e+00 : bf16
    %0 = vector.broadcast %cst : bf16 to vector<16x258xbf16>
    %c0 = arith.constant 0 : index
    %c0_0 = arith.constant 0 : index
    %1 = vector.load %arg7[%c0, %c0_0] : memref<16x258xbf16, #tpu.memory_space<vmem>>, vector<16x258xbf16>
    tpu.vector_store %arg7[%c0, %c0_0], %0 {strides = array<i32>} : memref<16x258xbf16, #tpu.memory_space<vmem>>, vector<16x258xbf16>,
    %cst_1 = arith.constant 0.000000e+00 : bf16
    %2 = vector.broadcast %cst_1 : bf16 to vector<16x258xbf16>
    %c0_2 = arith.constant 0 : index
    %c0_3 = arith.constant 0 : index
    %3 = vector.load %arg8[%c0_2, %c0_3] : memref<16x258xbf16, #tpu.memory_space<vmem>>, vector<16x258xbf16>
    tpu.vector_store %arg8[%c0_2, %c0_3], %2 {strides = array<i32>} : memref<16x258xbf16, #tpu.memory_space<vmem>>, vector<16x258xbf16>,
    %c0_4 = arith.constant 0 : index
    %c0_5 = arith.constant 0 : index
    %c0_6 = arith.constant 0 : index
    %4 = vector.load %arg1[%c0_4, %c0_5, %c0_6] : memref<1x4x16xbf16, #tpu.memory_space<vmem>>, vector<1x4x16xbf16>
    %5 = vector.shape_cast %4 : vector<1x4x16xbf16> to vector<4x16xbf16>
    %c0_7 = arith.constant 0 : index
    %c128 = arith.constant 128 : index
    %6 = vector.load %arg7[%c0_7, %c128] : memref<16x258xbf16, #tpu.memory_space<vmem>>, vector<4x16xbf16>
    tpu.vector_store %arg7[%c0_7, %c128], %5 {strides = array<i32>} : memref<16x258xbf16, #tpu.memory_space<vmem>>, vector<4x16xbf16>,
    %c0_8 = arith.constant 0 : index
    %c0_9 = arith.constant 0 : index
    %7 = vector.load %arg2[%c0_8, %c0_9] : memref<16x20xbf16, #tpu.memory_space<vmem>>, vector<16x20xbf16>
    %c0_10 = arith.constant 0 : index
    %c0_11 = arith.constant 0 : index
    %8 = vector.load %arg3[%c0_10, %c0_11] : memref<16x1xf32, #tpu.memory_space<vmem>>, vector<16x1xf32>
    %c0_12 = arith.constant 0 : index
    %c126 = arith.constant 126 : index
    %9 = vector.load %arg7[%c0_12, %c126] : memref<16x258xbf16, #tpu.memory_space<vmem>>, vector<4x128xbf16>
    %c0_13 = arith.constant 0 : index
    %c127 = arith.constant 127 : index
    %10 = vector.load %arg7[%c0_13, %c127] : memref<16x258xbf16, #tpu.memory_space<vmem>>, vector<4x128xbf16>
    %c0_14 = arith.constant 0 : index
    %c128_15 = arith.constant 128 : index
    %11 = vector.load %arg7[%c0_14, %c128_15] : memref<16x258xbf16, #tpu.memory_space<vmem>>, vector<4x128xbf16>
    %c0_16 = arith.constant 0 : index
    %c129 = arith.constant 129 : index
    %12 = vector.load %arg7[%c0_16, %c129] : memref<16x258xbf16, #tpu.memory_space<vmem>>, vector<4x128xbf16>
    %c0_17 = arith.constant 0 : index
    %c130 = arith.constant 130 : index
    %13 = vector.load %arg7[%c0_17, %c130] : memref<16x258xbf16, #tpu.memory_space<vmem>>, vector<4x128xbf16>
    %14 = tpu.concatenate %9, %10, %11, %12, %13 in 0 : vector<4x128xbf16>, vector<4x128xbf16>, vector<4x128xbf16>, vector<4x128xbf16>, vector<4x128xbf16> -> vector<20x128xbf16>
    %cst_18 = arith.constant dense<0.000000e+00> : vector<16x128xf32>
    %15 = tpu.matmul %7, %14, %cst_18 {dimension_numbers = #tpu.dot_dimension_numbers<[1], [0], [0], [1], [0, 0, 1, 1], [], []>} : vector<16x20xbf16>, vector<20x128xbf16>, vector<16x128xf32> -> vector<16x128xf32>
    %16 = vector.broadcast %8 : vector<16x1xf32> to vector<16x128xf32>
    %17 = arith.addf %15, %16 : vector<16x128xf32>
    %cst_19 = arith.constant 0.000000e+00 : f32
    %18 = vector.broadcast %cst_19 : f32 to vector<16x128xf32>
    %19 = arith.maximumf %17, %18 : vector<16x128xf32>
    %20 = tpu.iota {dimensions = array<i32: 1>} : vector<16x128xi32>
    %c16_i32 = arith.constant 16 : i32
    %21 = vector.broadcast %c16_i32 : i32 to vector<16x128xi32>
    %22 = arith.cmpi slt, %20, %21 : vector<16x128xi32>
    %cst_20 = arith.constant 0.000000e+00 : f32
    %23 = vector.broadcast %cst_20 : f32 to vector<16x128xf32>
    %24 = arith.select %22, %19, %23 : vector<16x128xi1>, vector<16x128xf32>
    %25 = arith.truncf %24 : vector<16x128xf32> to vector<16x128xbf16>
    %c0_21 = arith.constant 0 : index
    %c128_22 = arith.constant 128 : index
    %26 = vector.load %arg8[%c0_21, %c128_22] : memref<16x258xbf16, #tpu.memory_space<vmem>>, vector<16x128xbf16>
    tpu.vector_store %arg8[%c0_21, %c128_22], %25 {strides = array<i32>} : memref<16x258xbf16, #tpu.memory_space<vmem>>, vector<16x128xbf16>,
    %c0_23 = arith.constant 0 : index
    %c0_24 = arith.constant 0 : index
    %27 = vector.load %arg4[%c0_23, %c0_24] : memref<16x80xbf16, #tpu.memory_space<vmem>>, vector<16x80xbf16>
    %c0_25 = arith.constant 0 : index
    %c0_26 = arith.constant 0 : index
    %28 = vector.load %arg5[%c0_25, %c0_26] : memref<16x1xf32, #tpu.memory_space<vmem>>, vector<16x1xf32>
    %c0_27 = arith.constant 0 : index
    %c126_28 = arith.constant 126 : index
    %29 = vector.load %arg8[%c0_27, %c126_28] : memref<16x258xbf16, #tpu.memory_space<vmem>>, vector<16x128xbf16>
    %c0_29 = arith.constant 0 : index
    %c127_30 = arith.constant 127 : index
    %30 = vector.load %arg8[%c0_29, %c127_30] : memref<16x258xbf16, #tpu.memory_space<vmem>>, vector<16x128xbf16>
    %c0_31 = arith.constant 0 : index
    %c128_32 = arith.constant 128 : index
    %31 = vector.load %arg8[%c0_31, %c128_32] : memref<16x258xbf16, #tpu.memory_space<vmem>>, vector<16x128xbf16>
    %c0_33 = arith.constant 0 : index
    %c129_34 = arith.constant 129 : index
    %32 = vector.load %arg8[%c0_33, %c129_34] : memref<16x258xbf16, #tpu.memory_space<vmem>>, vector<16x128xbf16>
    %c0_35 = arith.constant 0 : index
    %c130_36 = arith.constant 130 : index
    %33 = vector.load %arg8[%c0_35, %c130_36] : memref<16x258xbf16, #tpu.memory_space<vmem>>, vector<16x128xbf16>
    %34 = tpu.concatenate %29, %30, %31, %32, %33 in 0 : vector<16x128xbf16>, vector<16x128xbf16>, vector<16x128xbf16>, vector<16x128xbf16>, vector<16x128xbf16> -> vector<80x128xbf16>
    %cst_37 = arith.constant dense<0.000000e+00> : vector<16x128xf32>
    %35 = tpu.matmul %27, %34, %cst_37 {dimension_numbers = #tpu.dot_dimension_numbers<[1], [0], [0], [1], [0, 0, 1, 1], [], []>} : vector<16x80xbf16>, vector<80x128xbf16>, vector<16x128xf32> -> vector<16x128xf32>
    %36 = vector.broadcast %28 : vector<16x1xf32> to vector<16x128xf32>
    %37 = arith.addf %35, %36 : vector<16x128xf32>
    %cst_38 = arith.constant 0.000000e+00 : f32
    %38 = vector.broadcast %cst_38 : f32 to vector<16x128xf32>
    %39 = arith.maximumf %37, %38 : vector<16x128xf32>
    %40 = arith.truncf %39 : vector<16x128xf32> to vector<16x128xbf16>
    %c0_39 = arith.constant 0 : index
    %c0_40 = arith.constant 0 : index
    %c0_41 = arith.constant 0 : index
    %41 = vector.load %arg6[%c0_39, %c0_40, %c0_41] : memref<1x16x128xbf16, #tpu.memory_space<vmem>>, vector<1x16x128xbf16>
    %42 = vector.shape_cast %41 : vector<1x16x128xbf16> to vector<16x128xbf16>
    %43 = vector.shape_cast %40 : vector<16x128xbf16> to vector<1x16x128xbf16>
    tpu.vector_store %arg6[%c0_39, %c0_40, %c0_41], %43 {strides = array<i32>} : memref<1x16x128xbf16, #tpu.memory_space<vmem>>, vector<1x16x128xbf16>,
    return
  }
  func.func @transform_0(%arg0: i32) -> (i32, i32, i32) {
    %c0_i32 = arith.constant 0 : i32
    %c0_i32_0 = arith.constant 0 : i32
    %c0_i32_1 = arith.constant 0 : i32
    return %arg0, %c0_i32, %c0_i32_0 : i32, i32, i32
  }
  func.func @transform_1(%arg0: i32) -> (i32, i32) {
    %c0_i32 = arith.constant 0 : i32
    %c0_i32_0 = arith.constant 0 : i32
    %c0_i32_1 = arith.constant 0 : i32
    return %c0_i32, %c0_i32_0 : i32, i32
  }
  func.func @transform_2(%arg0: i32) -> (i32, i32) {
    %c0_i32 = arith.constant 0 : i32
    %c0_i32_0 = arith.constant 0 : i32
    %c0_i32_1 = arith.constant 0 : i32
    return %c0_i32, %c0_i32_0 : i32, i32
  }
  func.func @transform_3(%arg0: i32) -> (i32, i32) {
    %c0_i32 = arith.constant 0 : i32
    %c0_i32_0 = arith.constant 0 : i32
    %c0_i32_1 = arith.constant 0 : i32
    return %c0_i32, %c0_i32_0 : i32, i32
  }
  func.func @transform_4(%arg0: i32) -> (i32, i32) {
    %c0_i32 = arith.constant 0 : i32
    %c0_i32_0 = arith.constant 0 : i32
    %c0_i32_1 = arith.constant 0 : i32
    return %c0_i32, %c0_i32_0 : i32, i32
  }
  func.func @transform_5(%arg0: i32) -> (i32, i32, i32) {
    %c0_i32 = arith.constant 0 : i32
    %c0_i32_0 = arith.constant 0 : i32
    %c0_i32_1 = arith.constant 0 : i32
    return %arg0, %c0_i32, %c0_i32_0 : i32, i32, i32
  }
}

</mosaic_0001>

<llo_original>
// kernel: tpu_custom_call.1
$region0: #{tpu_custom_call.1}
  #allocation0 [shape = 'u32[]', space=smem, size = 0x4, offset = 0x4, fixed_abs, tag = 'smem constant byte address 0x4 - core index']
  #allocation1 [shape = 'u32[144,128]{1,0:T(1,128)}', space=vmem, size = 0x12000, scoped, tag = 'internal scratch']
  #allocation2 [shape = 'bf16[16,258]{1,0:T(16,128)(2,1)}', space=vmem, size = 0x3000, scoped, tag = 'scratch operand']
  #allocation3 [shape = 'bf16[16,258]{1,0:T(16,128)(2,1)}', space=vmem, size = 0x3000, scoped, tag = 'scratch operand']
  %s0 = inlined_call_operand.hbm [shape: bf16[2,4,16], index: 0, kind: input, shape index: {}]
  %s1 = inlined_call_operand.hbm [shape: bf16[16,20], index: 1, kind: input, shape index: {}]
  %s2 = inlined_call_operand.hbm [shape: f32[16,1], index: 2, kind: input, shape index: {}]
  %s3 = inlined_call_operand.hbm [shape: bf16[16,80], index: 3, kind: input, shape index: {}]
  %s4 = inlined_call_operand.hbm [shape: f32[16,1], index: 4, kind: input, shape index: {}]
  %s5 = inlined_call_operand.hbm [shape: bf16[2,16,128], index: 5, kind: output, shape index: {}]
  %s6 = sld [smem:[#allocation0]]
  $region73: #{tpu_custom_call.1} parent=0
    _
  %s8 = ssub.s32 1, %s6
  %s9 = scalar_select 0, %s8, %s6
  $region1: #{tpu_custom_call.1} parent=0
    #allocation4 [shape = 'u8[2048]{0}', space=vmem, size = 0x800, scoped, tag = 'input window, operand 0']
    #allocation5 [shape = 's32[2]{0}', space=sflag, size = 0x8, scoped, tag = 'scoped memory for tpu_custom_call.1']
    #allocation6 [shape = 's32[2]{0}', space=sflag, size = 0x8, scoped, tag = 'scoped memory for tpu_custom_call.1']
    #allocation7 [shape = 'u8[4096]{0}', space=vmem, size = 0x1000, scoped, tag = 'input window, operand 1, single buffered']
    #allocation8 [shape = 's32[1]{0}', space=sflag, size = 0x4, scoped, tag = 'scoped memory for tpu_custom_call.1']
    #allocation9 [shape = 'u8[8192]{0}', space=vmem, size = 0x2000, scoped, tag = 'input window, operand 2, single buffered']
    #allocation10 [shape = 'u8[4096]{0}', space=vmem, size = 0x1000, scoped, tag = 'input window, operand 3, single buffered']
    #allocation11 [shape = 's32[1]{0}', space=sflag, size = 0x4, scoped, tag = 'scoped memory for tpu_custom_call.1']
    #allocation12 [shape = 'u8[8192]{0}', space=vmem, size = 0x2000, scoped, tag = 'input window, operand 4, single buffered']
    #allocation13 [shape = 'u8[8192]{0}', space=vmem, size = 0x2000, scoped, tag = 'output window, operand 0']
    %10 = vsyncpa [#allocation5], 0
    %s11 = scalar_lea.sflag [#allocation5], 1
    %12 = vsyncpa %s11, 0
    %13 = vsyncpa [#allocation8], 0
    %14 = vsyncpa [#allocation11], 0
    %15 = vsyncpa [#allocation6], 0
    %s16 = scalar_lea.sflag [#allocation6], 1
    %17 = vsyncpa %s16, 0
    loop: start=0, step=1, limit=4
    $region2: #{tpu_custom_call.1} parent=1 // loop_pre_header
      _
    $region3: #{tpu_custom_call.1} parent=1 // loop_header
      %s19 = sphi 0, %s23
      %p20 = scmp.ge.s32.totalorder %s19, 4
      %s29 = sphi 0, %s31
      %s32 = sphi 0, %s29
      %s33 = sphi 0, %s32
      %s49 = sphi 0, %s33
      %s53 = sphi 0, %s53
      %s55 = sphi 0, %s53
      %s56 = sphi 0, %s55
      %s70 = sphi 0, %s56
      %s74 = sphi 0, %s74
      %s76 = sphi 0, %s74
      %s77 = sphi 0, %s76
      %s91 = sphi 0, %s77
      %s95 = sphi 0, %s95
      %s97 = sphi 0, %s95
      %s98 = sphi 0, %s97
      %s112 = sphi 0, %s98
      %s116 = sphi 0, %s116
      %s118 = sphi 0, %s116
      %s119 = sphi 0, %s118
      %s133 = sphi 0, %s119
      %s139 = sphi 0, %s141
      %s142 = sphi 0, %s139
      %s143 = sphi 0, %s142
      %s159 = sphi 0, %s143
    $region4: #{tpu_custom_call.1} parent=1 // loop_header_branch
      %22 = sbr.rel (%p20) target = $region8
    $region5: #{tpu_custom_call.1} parent=1 // loop_body
      %s24 = ssub.s32 %s19, 1
      %s25 = ssub.s32 %s19, 2
      %s26 = sadd.s32 %s19, 1
      %s27 = ssub.s32 %s19, %s26
      %p28 = scmp.eq.s32.totalorder %s27, 0
      %s30 = sadd.s32 %s29, 1
      %s31 = scalar_select %p28, %s29, %s30
      %p34 = pneg %p28
      %p35 = scmp.eq.s32.totalorder %s19, 1
      %p36 = por %p34, %p35
      %p37 = scmp.ne.s32.totalorder %s29, %s32
      %p38 = scmp.eq.s32.totalorder %s19, 0
      %p39 = por %p37, %p38
      %p40 = scmp.ne.s32.totalorder %s29, %s32
      %p41 = scmp.eq.s32.totalorder %s24, 1
      %p42 = por %p40, %p41
      %p43 = scmp.ne.s32.totalorder %s32, %s33
      %p44 = scmp.eq.s32.totalorder %s24, 0
      %p45 = por %p43, %p44
      %p46 = scmp.ne.s32.totalorder %s32, %s33
      %p47 = scmp.eq.s32.totalorder %s25, 1
      %p48 = por %p46, %p47
      %p50 = scmp.ne.s32.totalorder %s33, %s49
      %p51 = scmp.eq.s32.totalorder %s25, 0
      %p52 = por %p50, %p51
      %s54 = sadd.s32 %s53, 1
      %p57 = scmp.eq.s32.totalorder %s19, 1
      %p58 = scmp.ne.s32.totalorder %s53, %s55
      %p59 = scmp.eq.s32.totalorder %s19, 0
      %p60 = por %p58, %p59
      %p61 = scmp.ne.s32.totalorder %s53, %s55
      %p62 = scmp.eq.s32.totalorder %s24, 1
      %p63 = por %p61, %p62
      %p64 = scmp.ne.s32.totalorder %s55, %s56
      %p65 = scmp.eq.s32.totalorder %s24, 0
      %p66 = por %p64, %p65
      %p67 = scmp.ne.s32.totalorder %s55, %s56
      %p68 = scmp.eq.s32.totalorder %s25, 1
      %p69 = por %p67, %p68
      %p71 = scmp.ne.s32.totalorder %s56, %s70
      %p72 = scmp.eq.s32.totalorder %s25, 0
      %p73 = por %p71, %p72
      %s75 = sadd.s32 %s74, 1
      %p78 = scmp.eq.s32.totalorder %s19, 1
      %p79 = scmp.ne.s32.totalorder %s74, %s76
      %p80 = scmp.eq.s32.totalorder %s19, 0
      %p81 = por %p79, %p80
      %p82 = scmp.ne.s32.totalorder %s74, %s76
      %p83 = scmp.eq.s32.totalorder %s24, 1
      %p84 = por %p82, %p83
      %p85 = scmp.ne.s32.totalorder %s76, %s77
      %p86 = scmp.eq.s32.totalorder %s24, 0
      %p87 = por %p85, %p86
      %p88 = scmp.ne.s32.totalorder %s76, %s77
      %p89 = scmp.eq.s32.totalorder %s25, 1
      %p90 = por %p88, %p89
      %p92 = scmp.ne.s32.totalorder %s77, %s91
      %p93 = scmp.eq.s32.totalorder %s25, 0
      %p94 = por %p92, %p93
      %s96 = sadd.s32 %s95, 1
      %p99 = scmp.eq.s32.totalorder %s19, 1
      %p100 = scmp.ne.s32.totalorder %s95, %s97
      %p101 = scmp.eq.s32.totalorder %s19, 0
      %p102 = por %p100, %p101
      %p103 = scmp.ne.s32.totalorder %s95, %s97
      %p104 = scmp.eq.s32.totalorder %s24, 1
      %p105 = por %p103, %p104
      %p106 = scmp.ne.s32.totalorder %s97, %s98
      %p107 = scmp.eq.s32.totalorder %s24, 0
      %p108 = por %p106, %p107
      %p109 = scmp.ne.s32.totalorder %s97, %s98
      %p110 = scmp.eq.s32.totalorder %s25, 1
      %p111 = por %p109, %p110
      %p113 = scmp.ne.s32.totalorder %s98, %s112
      %p114 = scmp.eq.s32.totalorder %s25, 0
      %p115 = por %p113, %p114
      %s117 = sadd.s32 %s116, 1
      %p120 = scmp.eq.s32.totalorder %s19, 1
      %p121 = scmp.ne.s32.totalorder %s116, %s118
      %p122 = scmp.eq.s32.totalorder %s19, 0
      %p123 = por %p121, %p122
      %p124 = scmp.ne.s32.totalorder %s116, %s118
      %p125 = scmp.eq.s32.totalorder %s24, 1
      %p126 = por %p124, %p125
      %p127 = scmp.ne.s32.totalorder %s118, %s119
      %p128 = scmp.eq.s32.totalorder %s24, 0
      %p129 = por %p127, %p128
      %p130 = scmp.ne.s32.totalorder %s118, %s119
      %p131 = scmp.eq.s32.totalorder %s25, 1
      %p132 = por %p130, %p131
      %p134 = scmp.ne.s32.totalorder %s119, %s133
      %p135 = scmp.eq.s32.totalorder %s25, 0
      %p136 = por %p134, %p135
      %s137 = ssub.s32 %s19, %s26
      %p138 = scmp.eq.s32.totalorder %s137, 0
      %s140 = sadd.s32 %s139, 1
      %s141 = scalar_select %p138, %s139, %s140
      %p144 = pneg %p138
      %p145 = scmp.eq.s32.totalorder %s19, 1
      %p146 = por %p144, %p145
      %p147 = scmp.ne.s32.totalorder %s139, %s142
      %p148 = scmp.eq.s32.totalorder %s19, 0
      %p149 = por %p147, %p148
      %p150 = scmp.ne.s32.totalorder %s139, %s142
      %p151 = scmp.eq.s32.totalorder %s24, 1
      %p152 = por %p150, %p151
      %p153 = scmp.ne.s32.totalorder %s142, %s143
      %p154 = scmp.eq.s32.totalorder %s24, 0
      %p155 = por %p153, %p154
      %p156 = scmp.ne.s32.totalorder %s142, %s143
      %p157 = scmp.eq.s32.totalorder %s25, 1
      %p158 = por %p156, %p157
      %p160 = scmp.ne.s32.totalorder %s143, %s159
      %p161 = scmp.eq.s32.totalorder %s25, 0
      %p162 = por %p160, %p161
      %p163 = scmp.le.s32.totalorder 1, %s19
      %p164 = scmp.lt.s32.totalorder %s19, 3
      %p165 = pnand %p163, %p164
      %p166 = pneg %p165
      // Predicated region
      $region9: #{tpu_custom_call.1} parent=5 // pred_check
        _
      $region10: #{tpu_custom_call.1} parent=5 // pred_check_branch
        %168 = sbr.rel (%p165) target = $region12
      $region11: #{tpu_custom_call.1} parent=5 // pred_region
        %s169 = ssub.s32 %s19, 1
        // Predicated region
        $region13: #{tpu_custom_call.1} parent=11 // pred_check
          %p170 = pneg %p66
        $region14: #{tpu_custom_call.1} parent=11 // pred_check_branch
          %172 = sbr.rel (%p170) target = $region16
        $region15: #{tpu_custom_call.1} parent=11 // pred_region
          %s174 = ssub.s32 128, 128
          %175 = vsyncadd [#allocation8], %s174
          %s176 = sshll.u32 [#allocation7], 4
          %s177 = int_to_ptr.vmem [resolvable:$true] %s176
          %182 = dma.hbm_to_vmem [thread:$0]  %s1, 128, %s177, [#allocation8], 64, 64, 4
        $region16: #{tpu_custom_call.1} parent=11 // pred_fallthru
          _
        // Predicated region
        $region17: #{tpu_custom_call.1} parent=11 // pred_check
          %p183 = pneg %p87
        $region18: #{tpu_custom_call.1} parent=11 // pred_check_branch
          %185 = sbr.rel (%p183) target = $region20
        $region19: #{tpu_custom_call.1} parent=11 // pred_region
          %s187 = ssub.s32 256, 256
          %188 = vsyncadd [#allocation8], %s187
          %s189 = sshll.u32 [#allocation9], 4
          %s190 = int_to_ptr.vmem [resolvable:$true] %s189
          %195 = dma.hbm_to_vmem [thread:$0]  %s2, 256, %s190, [#allocation8], 128, 128, 8
        $region20: #{tpu_custom_call.1} parent=11 // pred_fallthru
          _
        // Predicated region
        $region21: #{tpu_custom_call.1} parent=11 // pred_check
          %p196 = pneg %p108
        $region22: #{tpu_custom_call.1} parent=11 // pred_check_branch
          %198 = sbr.rel (%p196) target = $region24
        $region23: #{tpu_custom_call.1} parent=11 // pred_region
          %s200 = ssub.s32 128, 128
          %201 = vsyncadd [#allocation11], %s200
          %s202 = sshll.u32 [#allocation10], 4
          %s203 = int_to_ptr.vmem [resolvable:$true] %s202
          %208 = dma.hbm_to_vmem [thread:$0]  %s3, 128, %s203, [#allocation11], 64, 64, 4
        $region24: #{tpu_custom_call.1} parent=11 // pred_fallthru
          _
        // Predicated region
        $region25: #{tpu_custom_call.1} parent=11 // pred_check
          %p209 = pneg %p129
        $region26: #{tpu_custom_call.1} parent=11 // pred_check_branch
          %211 = sbr.rel (%p209) target = $region28
        $region27: #{tpu_custom_call.1} parent=11 // pred_region
          %s213 = ssub.s32 256, 256
          %214 = vsyncadd [#allocation11], %s213
          %s215 = sshll.u32 [#allocation12], 4
          %s216 = int_to_ptr.vmem [resolvable:$true] %s215
          %221 = dma.hbm_to_vmem [thread:$0]  %s4, 256, %s216, [#allocation11], 128, 128, 8
        $region28: #{tpu_custom_call.1} parent=11 // pred_fallthru
          _
      $region12: #{tpu_custom_call.1} parent=5 // pred_fallthru
        _
      %p222 = scmp.lt.s32.totalorder %s19, 2
      // Predicated region
      $region29: #{tpu_custom_call.1} parent=5 // pred_check
        %p223 = pneg %p222
      $region30: #{tpu_custom_call.1} parent=5 // pred_check_branch
        %225 = sbr.rel (%p223) target = $region32
      $region31: #{tpu_custom_call.1} parent=5 // pred_region
        // Predicated region
        $region33: #{tpu_custom_call.1} parent=31 // pred_check
          %p226 = pneg %p39
        $region34: #{tpu_custom_call.1} parent=31 // pred_check_branch
          %228 = sbr.rel (%p226) target = $region36
        $region35: #{tpu_custom_call.1} parent=31 // pred_region
          %s229 = sand.u32 %s29, 1
          %s230 = scalar_lea.sflag [#allocation5], %s229
          %s231 = sand.u32 %s29, 1
          %s232 = smul.addr %s231, 2
          %s233 = scalar_lea.vmem [#allocation4], %s232
          %s235 = ssub.s32 32, 32
          %236 = vsyncadd %s230, %s235
          %s237 = smul.addr %s19, 32
          %s238 = scalar_lea.hbm %s0, %s237
          %s240 = sshll.u32 %s233, 4
          %s241 = int_to_ptr.vmem [resolvable:$true] %s240
          %243 = dma.hbm_to_vmem [thread:$0]  %s238, 32, %s241, %s230
        $region36: #{tpu_custom_call.1} parent=31 // pred_fallthru
          _
      $region32: #{tpu_custom_call.1} parent=5 // pred_fallthru
        _
      %p244 = scmp.le.s32.totalorder 1, %s19
      %p245 = scmp.lt.s32.totalorder %s19, 3
      %p246 = pnand %p244, %p245
      %p247 = pneg %p246
      // Predicated region
      $region37: #{tpu_custom_call.1} parent=5 // pred_check
        _
      $region38: #{tpu_custom_call.1} parent=5 // pred_check_branch
        %249 = sbr.rel (%p246) target = $region40
      $region39: #{tpu_custom_call.1} parent=5 // pred_region
        %s250 = ssub.s32 %s19, 1
        %s251 = sand.u32 %s32, 1
        %s252 = scalar_lea.sflag [#allocation5], %s251
        %s253 = sand.u32 %s32, 1
        %s254 = smul.addr %s253, 2
        %s255 = scalar_lea.vmem [#allocation4], %s254
        // Predicated region
        $region41: #{tpu_custom_call.1} parent=39 // pred_check
          %p256 = pneg %p45
        $region42: #{tpu_custom_call.1} parent=39 // pred_check_branch
          %258 = sbr.rel (%p256) target = $region44
        $region43: #{tpu_custom_call.1} parent=39 // pred_region
          %259 = dma.done %s252, 32
        $region44: #{tpu_custom_call.1} parent=39 // pred_fallthru
          _
        // Predicated region
        $region45: #{tpu_custom_call.1} parent=39 // pred_check
          %p260 = pneg %p66
        $region46: #{tpu_custom_call.1} parent=39 // pred_check_branch
          %262 = sbr.rel (%p260) target = $region48
        $region47: #{tpu_custom_call.1} parent=39 // pred_region
          %263 = dma.done [#allocation8], 128
        $region48: #{tpu_custom_call.1} parent=39 // pred_fallthru
          _
        // Predicated region
        $region49: #{tpu_custom_call.1} parent=39 // pred_check
          %p264 = pneg %p87
        $region50: #{tpu_custom_call.1} parent=39 // pred_check_branch
          %266 = sbr.rel (%p264) target = $region52
        $region51: #{tpu_custom_call.1} parent=39 // pred_region
          %267 = dma.done [#allocation8], 256
        $region52: #{tpu_custom_call.1} parent=39 // pred_fallthru
          _
        // Predicated region
        $region53: #{tpu_custom_call.1} parent=39 // pred_check
          %p268 = pneg %p108
        $region54: #{tpu_custom_call.1} parent=39 // pred_check_branch
          %270 = sbr.rel (%p268) target = $region56
        $region55: #{tpu_custom_call.1} parent=39 // pred_region
          %271 = dma.done [#allocation11], 128
        $region56: #{tpu_custom_call.1} parent=39 // pred_fallthru
          _
        // Predicated region
        $region57: #{tpu_custom_call.1} parent=39 // pred_check
          %p272 = pneg %p129
        $region58: #{tpu_custom_call.1} parent=39 // pred_check_branch
          %274 = sbr.rel (%p272) target = $region60
        $region59: #{tpu_custom_call.1} parent=39 // pred_region
          %275 = dma.done [#allocation11], 256
        $region60: #{tpu_custom_call.1} parent=39 // pred_fallthru
          _
        %s276 = sand.u32 %s32, 1
        %s277 = scalar_lea.sflag [#allocation5], %s276
        %s278 = sand.u32 %s32, 1
        %s279 = smul.addr %s278, 2
        %s280 = scalar_lea.vmem [#allocation4], %s279
        %p281 = pneg %p45
        %p282 = pneg %p42
        %p283 = pneg %p66
        %p284 = pneg %p63
        %p285 = pneg %p87
        %p286 = pneg %p84
        %p287 = pneg %p108
        %p288 = pneg %p105
        %p289 = pneg %p129
        %p290 = pneg %p126
        %p291 = pneg %p155
        %p292 = pneg %p152
        %s293 = sand.u32 %s142, 1
        %s294 = scalar_lea.sflag [#allocation6], %s293
        %s295 = sand.u32 %s142, 1
        %s296 = smul.addr %s295, 8
        %s297 = scalar_lea.vmem [#allocation13], %s296
        %299 = vst [vmem:[#allocation2] sm:$0xff] 0
        %300 = vst [vmem:[#allocation2 + $0x8] sm:$0xff] 0
        %vm301 = vcmask 15360
        %302 = vst.msk [vmem:[#allocation2 + $0x10] sm:$0xff] %vm301, 0
        %303 = vst [vmem:[#allocation3] sm:$0xff] 0
        %304 = vst [vmem:[#allocation3 + $0x8] sm:$0xff] 0
        %305 = vst.msk [vmem:[#allocation3 + $0x10] sm:$0xff] %vm301, 0
        %v306 = vld [vmem:[%s255] sm:$0x3]
        %vm307 = vcmask 123904
        %308 = vst.msk [vmem:[#allocation2 + $0x8] sm:$0x3] %vm307, %v306
        %v309 = vld [vmem:[#allocation7] sm:$0xf]
        %v310 = vld [vmem:[#allocation7 + $0x4] sm:$0xf]
        %v311 = vld [vmem:[#allocation9] sm:$0xff]
        %v312 = vld [vmem:[#allocation9 + $0x8] sm:$0xff]
        %v313 = vld [vmem:[#allocation2] sm:$0x3]
        %v314 = vld [vmem:[#allocation2 + $0x8] sm:$0x3]
        %v315 = vld [vmem:[#allocation2 + $0x10] sm:$0x3]
        %v318 = vrot.slane %v313, 6
        %v319 = vrot.slane %v314, 6
        %320 = vrot.lane.b32.xlu0 %v318, 127
        %v321 = vpop.permute.xlu0 %320
        %322 = vrot.lane.b32.xlu0 %v319, 127
        %v323 = vpop.permute.xlu0 %322
        %vm324 = vcmask 1039360
        %v325 = vsel %vm324, %v321, %v323
        %v326 = vrot.slane %v314, 4
        %327 = vrot.lane.b32.xlu0 %v326, 126
        %v328 = vpop.permute.xlu0 %327
        %v330 = vrot.slane %v314, 2
        %v331 = vrot.slane %v315, 2
        %332 = vrot.lane.b32.xlu0 %v330, 125
        %v333 = vpop.permute.xlu0 %332
        %334 = vrot.lane.b32.xlu0 %v331, 125
        %v335 = vpop.permute.xlu0 %334
        %vm336 = vcmask 1022976
        %v337 = vsel %vm336, %v333, %v335
        %338 = vrot.lane.b32.xlu0 %v314, 124
        %v339 = vpop.permute.xlu0 %338
        %340 = vrot.lane.b32.xlu0 %v315, 124
        %v341 = vpop.permute.xlu0 %340
        %vm342 = vcmask 1014784
        %v343 = vsel %vm342, %v339, %v341
        %vm344 = vcmask 1041408
        %v347 = vsel %vm344, %v313, %v325
        %v350 = vsel %vm344, %v314, %v323
        %vm351 = vcmask 1043456
        %v353 = vsel %vm351, %v347, %v328
        %v354 = vsel %vm351, %v350, %v328
        %vm355 = vcmask 1045504
        %v357 = vsel %vm355, %v353, %v333
        %v359 = vsel %vm355, %v354, %v337
        %361 = vset.pattern.permute.xlu0 0
        %362 = vperm.xlu0 %361, %v311
        %v363 = vpop.permute.xlu0 %362
        %366 = vset.pattern.permute.xlu0 0
        %367 = vperm.xlu0 %366, %v312
        %v368 = vpop.permute.xlu0 %367
        %v372 = vunpack.c.l.b16 %v309
        %v373 = vunpack.c.l.b16 %v310
        %v374 = vpack.c.b16 %v373, %v372
        %377 = vrot.lane.b32.xlu0 %v357, 2
        %v378 = vpop.permute.xlu0 %377
        %379 = vrot.lane.b32.xlu0 %v359, 2
        %v380 = vpop.permute.xlu0 %379
        %381 = vrot.lane.b32.xlu0 %v339, 2
        %v382 = vpop.permute.xlu0 %381
        %383 = vrot.lane.b32.xlu0 %v343, 2
        %v384 = vpop.permute.xlu0 %383
        %vm385 = vcmask 15360
        %v386 = vsel %vm385, %v378, %v380
        %v387 = vsel %vm385, %v382, %v384
        %vm389 = vcmask 162816
        %v391 = vsel %vm389, %v374, 0
        %v394 = vsel %vm344, %v387, 0
        %396 = vmatprep.subr.bf16.mxu0 0
        %397 = vmatpush1.bf16.msra.mxu0 %v386
        %398 = vmatprep.subr.bf16.mxu0 0
        %399 = vmatpush1.bf16.msra.mxu0 %v394
        %400 = vmatprep.subr.bf16.mxu0 0
        %401 = vmatpush1.bf16.msra.mxu0 0
        %402 = vmatprep.subr.bf16.mxu0 0
        %403 = vmatpush1.bf16.msra.mxu0 0
        %404 = vmatprep.subr.bf16.mxu0 0
        %405 = vmatpush1.bf16.msra.mxu0 0
        %406 = vmatprep.subr.bf16.mxu0 0
        %407 = vmatpush1.bf16.msra.mxu0 0
        %408 = vmatprep.subr.bf16.mxu0 0
        %409 = vmatpush1.bf16.msra.mxu0 0
        %410 = vmatprep.subr.bf16.mxu0 0
        %411 = vmatpush1.bf16.msra.mxu0 0
        %412 = vmatprep.subr.bf16.mxu0 0
        %413 = vmatpush1.bf16.msra.mxu0 0
        %414 = vmatprep.subr.bf16.mxu0 0
        %415 = vmatpush1.bf16.msra.mxu0 0
        %416 = vmatprep.subr.bf16.mxu0 0
        %417 = vmatpush1.bf16.msra.mxu0 0
        %418 = vmatprep.subr.bf16.mxu0 0
        %419 = vmatpush1.bf16.msra.mxu0 0
        %420 = vmatprep.subr.bf16.mxu0 0
        %421 = vmatpush1.bf16.msra.mxu0 0
        %422 = vmatprep.subr.bf16.mxu0 0
        %423 = vmatpush1.bf16.msra.mxu0 0
        %424 = vmatprep.subr.bf16.mxu0 0
        %425 = vmatpush1.bf16.msra.mxu0 0
        %426 = vmatprep.subr.bf16.mxu0 0
        %427 = vmatpush1.bf16.msra.mxu0 0
        %428 = vmatprep.mubr.bf16.mxu0 0
        %429 = vmatmul.mubr.bf16.gmra.mrb[0].mxu0 %v391
        %v430 = vpop.f32.mrb[0].mxu0
        %v431 = vadd.f32 %v363, %v430
        %v432 = vpop.f32.mrb[0].mxu0
        %v433 = vpop.f32.mrb[0].mxu0
        %v434 = vadd.f32 %v368, %v433
        %v435 = vpop.f32.mrb[0].mxu0
        %436 = vdwg.mxu0
        %v437 = vmax.f32 %v431, 0.0
        %v438 = vmax.f32 %v434, 0.0
        %v439 = vlaneseq
        %v440 = vand.u32 %v439, 127
        %vm441 = vcmp.lt.s32.totalorder %v440, 16
        %v442 = vsel %vm441, %v437, 0.0
        %v443 = vsel %vm441, %v438, 0.0
        %v444 = vpack.c.bf16 %v443, %v442
        %445 = vst [vmem:[#allocation3 + $0x8] sm:$0xff] %v444
        %v446 = vld [vmem:[#allocation10] sm:$0xf]
        %v447 = vld [vmem:[#allocation10 + $0x4] sm:$0xf]
        %v448 = vld [vmem:[#allocation12] sm:$0xff]
        %v449 = vld [vmem:[#allocation12 + $0x8] sm:$0xff]
        %v450 = vld [vmem:[#allocation3] sm:$0xff]
        %v451 = vld [vmem:[#allocation3 + $0x8] sm:$0xff]
        %v452 = vld [vmem:[#allocation3 + $0x10] sm:$0xff]
        %455 = vrot.lane.b32.xlu0 %v450, 127
        %v456 = vpop.permute.xlu0 %455
        %457 = vrot.lane.b32.xlu0 %v451, 127
        %v458 = vpop.permute.xlu0 %457
        %v459 = vsel %vm324, %v456, %v458
        %460 = vrot.lane.b32.xlu0 %v451, 126
        %v461 = vpop.permute.xlu0 %460
        %463 = vrot.lane.b32.xlu0 %v451, 125
        %v464 = vpop.permute.xlu0 %463
        %465 = vrot.lane.b32.xlu0 %v452, 125
        %v466 = vpop.permute.xlu0 %465
        %v467 = vsel %vm336, %v464, %v466
        %468 = vrot.lane.b32.xlu0 %v451, 124
        %v469 = vpop.permute.xlu0 %468
        %470 = vrot.lane.b32.xlu0 %v452, 124
        %v471 = vpop.permute.xlu0 %470
        %v472 = vsel %vm342, %v469, %v471
        %474 = vset.pattern.permute.xlu0 0
        %475 = vperm.xlu0 %474, %v448
        %v476 = vpop.permute.xlu0 %475
        %479 = vset.pattern.permute.xlu0 0
        %480 = vperm.xlu0 %479, %v449
        %v481 = vpop.permute.xlu0 %480
        %v485 = vunpack.c.l.b16 %v446
        %v486 = vunpack.c.l.b16 %v447
        %v487 = vpack.c.b16 %v486, %v485
        %488 = vrot.lane.b32.xlu0 %v450, 2
        %v489 = vpop.permute.xlu0 %488
        %490 = vrot.lane.b32.xlu0 %v451, 2
        %v491 = vpop.permute.xlu0 %490
        %492 = vrot.lane.b32.xlu0 %v459, 2
        %v493 = vpop.permute.xlu0 %492
        %494 = vrot.lane.b32.xlu0 %v458, 2
        %v495 = vpop.permute.xlu0 %494
        %496 = vrot.lane.b32.xlu0 %v461, 2
        %v497 = vpop.permute.xlu0 %496
        %498 = vrot.lane.b32.xlu0 %v464, 2
        %v499 = vpop.permute.xlu0 %498
        %500 = vrot.lane.b32.xlu0 %v467, 2
        %v501 = vpop.permute.xlu0 %500
        %502 = vrot.lane.b32.xlu0 %v469, 2
        %v503 = vpop.permute.xlu0 %502
        %504 = vrot.lane.b32.xlu0 %v472, 2
        %v505 = vpop.permute.xlu0 %504
        %v506 = vsel %vm385, %v489, %v491
        %v507 = vsel %vm385, %v493, %v495
        %v508 = vsel %vm385, %v499, %v501
        %v509 = vsel %vm385, %v503, %v505
        %vm515 = vcmask 654336
        %v517 = vsel %vm515, %v487, 0
        %519 = vmatprep.subr.bf16.mxu0 0
        %520 = vmatpush1.bf16.msra.mxu0 %v506
        %521 = vmatprep.subr.bf16.mxu0 0
        %522 = vmatpush1.bf16.msra.mxu0 %v507
        %523 = vmatprep.subr.bf16.mxu0 0
        %524 = vmatpush1.bf16.msra.mxu0 %v497
        %525 = vmatprep.subr.bf16.mxu0 0
        %526 = vmatpush1.bf16.msra.mxu0 %v508
        %527 = vmatprep.subr.bf16.mxu0 0
        %528 = vmatpush1.bf16.msra.mxu0 %v509
        %529 = vmatprep.subr.bf16.mxu0 0
        %530 = vmatpush1.bf16.msra.mxu0 0
        %531 = vmatprep.subr.bf16.mxu0 0
        %532 = vmatpush1.bf16.msra.mxu0 0
        %533 = vmatprep.subr.bf16.mxu0 0
        %534 = vmatpush1.bf16.msra.mxu0 0
        %535 = vmatprep.subr.bf16.mxu0 0
        %536 = vmatpush1.bf16.msra.mxu0 0
        %537 = vmatprep.subr.bf16.mxu0 0
        %538 = vmatpush1.bf16.msra.mxu0 0
        %539 = vmatprep.subr.bf16.mxu0 0
        %540 = vmatpush1.bf16.msra.mxu0 0
        %541 = vmatprep.subr.bf16.mxu0 0
        %542 = vmatpush1.bf16.msra.mxu0 0
        %543 = vmatprep.subr.bf16.mxu0 0
        %544 = vmatpush1.bf16.msra.mxu0 0
        %545 = vmatprep.subr.bf16.mxu0 0
        %546 = vmatpush1.bf16.msra.mxu0 0
        %547 = vmatprep.subr.bf16.mxu0 0
        %548 = vmatpush1.bf16.msra.mxu0 0
        %549 = vmatprep.subr.bf16.mxu0 0
        %550 = vmatpush1.bf16.msra.mxu0 0
        %551 = vmatprep.mubr.bf16.mxu0 0
        %552 = vmatmul.mubr.bf16.gmra.mrb[0].mxu0 %v517
        %v553 = vpop.f32.mrb[0].mxu0
        %v554 = vadd.f32 %v476, %v553
        %v555 = vpop.f32.mrb[0].mxu0
        %v556 = vpop.f32.mrb[0].mxu0
        %v557 = vadd.f32 %v481, %v556
        %v558 = vpop.f32.mrb[0].mxu0
        %559 = vdwg.mxu0
        %v560 = vmax.f32 %v554, 0.0
        %v561 = vmax.f32 %v557, 0.0
        %v562 = vpack.c.bf16 %v561, %v560
        %v564 = vunpack.c.l.b16 %v562
        %v565 = vunpack.c.h.b16 %v562
        %v566 = vpack.c.b16 %v564, %v564
        %v567 = vpack.c.b16 %v565, %v565
        %570 = vst [vmem:[%s297] sm:$0xf] %v566
        %571 = vst [vmem:[%s297 + $0x4] sm:$0xf] %v567
        %s572 = sand.u32 %s142, 1
        %s573 = scalar_lea.sflag [#allocation6], %s572
        %s574 = sand.u32 %s142, 1
        %s575 = smul.addr %s574, 8
        %s576 = scalar_lea.vmem [#allocation13], %s575
        // Predicated region
        $region61: #{tpu_custom_call.1} parent=39 // pred_check
          %p577 = pneg %p152
        $region62: #{tpu_custom_call.1} parent=39 // pred_check_branch
          %579 = sbr.rel (%p577) target = $region64
        $region63: #{tpu_custom_call.1} parent=39 // pred_region
          %s581 = ssub.s32 128, 128
          %582 = vsyncadd %s573, %s581
          %s583 = smul.addr %s24, 2
          %s584 = smul.addr %s583, 64
          %s585 = scalar_lea.hbm %s5, %s584
          %s586 = sshll.u32 %s576, 4
          %s587 = int_to_ptr.vmem [resolvable:$true] %s586
          %592 = dma.vmem_to_hbm [thread:$0]  %s587, 128, %s585, %s573, 64, 64, 4
        $region64: #{tpu_custom_call.1} parent=39 // pred_fallthru
          _
      $region40: #{tpu_custom_call.1} parent=5 // pred_fallthru
        _
      %p593 = scmp.le.s32.totalorder 2, %s19
      // Predicated region
      $region65: #{tpu_custom_call.1} parent=5 // pred_check
        %p594 = pneg %p593
      $region66: #{tpu_custom_call.1} parent=5 // pred_check_branch
        %596 = sbr.rel (%p594) target = $region68
      $region67: #{tpu_custom_call.1} parent=5 // pred_region
        %s597 = ssub.s32 %s19, 2
        // Predicated region
        $region69: #{tpu_custom_call.1} parent=67 // pred_check
          %p598 = pneg %p158
        $region70: #{tpu_custom_call.1} parent=67 // pred_check_branch
          %600 = sbr.rel (%p598) target = $region72
        $region71: #{tpu_custom_call.1} parent=67 // pred_region
          %s601 = sand.u32 %s143, 1
          %s602 = scalar_lea.sflag [#allocation6], %s601
          %s603 = sand.u32 %s143, 1
          %s604 = smul.addr %s603, 8
          %s605 = scalar_lea.vmem [#allocation13], %s604
          %606 = dma.done %s602, 128
        $region72: #{tpu_custom_call.1} parent=67 // pred_fallthru
          _
      $region68: #{tpu_custom_call.1} parent=5 // pred_fallthru
        _
    $region6: #{tpu_custom_call.1} parent=1 // loop_footer
      %s23 = sadd.s32 1, %s19
    $region7: #{tpu_custom_call.1} parent=1 // loop_footer_branch
      %18 = sbr.rel target = $region3
    $region8: #{tpu_custom_call.1} parent=1 // loop_exit
      _
    %607 = vsyncpa [#allocation5], 1
    %s608 = scalar_lea.sflag [#allocation5], 1
    %609 = vsyncpa %s608, 1
    %610 = vsyncpa [#allocation8], 1
    %611 = vsyncpa [#allocation11], 1
    %612 = vsyncpa [#allocation6], 1
    %s613 = scalar_lea.sflag [#allocation6], 1
    %614 = vsyncpa %s613, 1

</llo_original>
